<compile_context>
chip_gen: v5e
topology: v5e:2x2
jax: 0.10.0
libtpu: 0.0.40
codegen_flags: <defaults>
</compile_context>

<pallas_src>
import functools

import jax
import jax.numpy as jnp
from jax import lax
from jax.experimental import pallas as pl
from jax.experimental.pallas import tpu as pltpu


# Scoped-VMEM budget: safe on v5e/v6e (128 MiB physical) and v7x (64 MiB).
_VMEM_LIMIT_BYTES = 32 * 1024 * 1024
# Per-grid-step f32 working-set budget used when packing batch elements.
_STEP_BUDGET_BYTES = 4 * 1024 * 1024
# Keep at least this many steps on a parallel grid axis (v7x has 2 TensorCores).
_MIN_GRID_STEPS = 4


def _round_up(n, m):
    return ((n + m - 1) // m) * m


@functools.lru_cache(maxsize=1)
def _tile_target():
    """1024-wide output tiles on 128-MiB-VMEM parts (v5e/v6e), 512 on v7x (64 MiB)."""
    try:
        info = pltpu.get_tpu_info()
        if getattr(info, "vmem_capacity_bytes", 0) >= 96 * 1024 * 1024:
            return 1024
    except Exception:
        pass
    return 512


def _pick_tile(n, target):
    """Largest multiple-of-128 tile <= target that divides n (n is a 128-multiple)."""
    if n <= target:
        return n
    for t in range(target, 127, -128):
        if n % t == 0:
            return t
    return 128


def _pick_batch_tile(b, d, n, tj, tk):
    """Pack batch elements per grid step when the whole (N, N) fits one tile,
    but keep >= _MIN_GRID_STEPS steps so megacore / v7x 2-TC sharding has work."""
    if (n // tj) * (n // tk) > 1:
        return 1
    per_batch = 4 * (d * tj + d * tk + tk + tj * tk)  # xj + yk + colbias + K tile (f32)
    cap = max(1, _STEP_BUDGET_BYTES // max(per_batch, 1))
    cap = min(cap, max(1, b // _MIN_GRID_STEPS))
    bt = 1
    for cand in range(1, b + 1):
        if b % cand == 0 and cand <= cap:
            bt = cand
    return bt


def _pick_sumsq_batch_tile(b, d, n):
    per_batch = 4 * 2 * (d + 1) * n
    cap = max(1, _STEP_BUDGET_BYTES // max(per_batch, 1))
    cap = min(cap, max(1, b // 2))
    bt = 1
    for cand in range(1, b + 1):
        if b % cand == 0 and cand <= cap:
            bt = cand
    return bt


def _mosaic_params(semantics):
    return pltpu.CompilerParams(
        dimension_semantics=semantics,
        vmem_limit_bytes=_VMEM_LIMIT_BYTES,
    )


def _pad_lanes(x, y, n):
    """Pad the last (lane) dim of X/Y up to a multiple of 128."""
    np_ = _round_up(n, 128)
    if np_ == n:
        return x, y, np_
    pad = ((0, 0), (0, 0), (0, np_ - n))
    return jnp.pad(x, pad), jnp.pad(y, pad), np_


def _torch_median(a):
    """torch.median over a flattened tensor: the lower of the two middle values."""
    flat = jnp.sort(a.reshape(-1))
    return flat[(flat.size - 1) // 2]


# -----------------------------------------------------------------------------
# Kernel bodies
# -----------------------------------------------------------------------------
def _sumsq_kernel(x_ref, y_ref, xx_ref, yy_ref):
    # x_ref, y_ref: (bt, D, tk); outputs (bt, 1, tk).
    x = jnp.tanh(x_ref[...])
    y = jnp.tanh(y_ref[...])
    xx_ref[...] = jnp.sum(x * x, axis=1, keepdims=True)
    yy_ref[...] = jnp.sum(y * y, axis=1, keepdims=True)


def _gram_kernel(xj_ref, yk_ref, xy_ref):
    # xj_ref: (bt, D, tj), yk_ref: (bt, D, tk) -> xy tile (bt, tj, tk).
    xj = jnp.tanh(xj_ref[...])
    yk = jnp.tanh(yk_ref[...])
    xy_ref[...] = lax.dot_general(
        xj, yk,
        dimension_numbers=(((1,), (1,)), ((0,), (0,))),
        preferred_element_type=jnp.float32,
        precision=lax.Precision.HIGHEST,
    )


def _rbf_fused_kernel(neg_inv_ref, cb_ref, xj_ref, yk_ref, k_ref):
    # Fused tanh -> Gram tile -> exp; colbias = XX + YY streamed as (bt,1,tk).
    # Constants folded: LHS scaled by -2/(bw+eps), colbias by -1/(bw+eps), so
    # the N^2 epilogue is add + max + exp only.
    neg_inv = neg_inv_ref[0]                                # -1/(bw+eps), SMEM scalar
    xj = jnp.tanh(xj_ref[...]) * (-2.0 * neg_inv)           # (bt, D, tj)
    yk = jnp.tanh(yk_ref[...])                              # (bt, D, tk)
    xy = lax.dot_general(
        xj, yk,
        dimension_numbers=(((1,), (1,)), ((0,), (0,))),
        preferred_element_type=jnp.float32,
        precision=lax.Precision.HIGHEST,
    )                                                       # (bt, tj, tk)
    # PyTorch broadcast quirk preserved: colbias indexed by the column k.
    k_ref[...] = jnp.exp(jnp.maximum(xy + cb_ref[...] * neg_inv, -88.0))


def _rbf_sum_kernel(neg_inv_ref, cb_ref, xj_ref, yk_ref, sum_ref):
    # Same math as _rbf_fused_kernel but reduces the K tile to a (1,1,tk)
    # lane-vector of partial sums accumulated in the resident output block.
    j = pl.program_id(1)
    k = pl.program_id(2)

    @pl.when((j == 0) & (k == 0))
    def _():
        sum_ref[...] = jnp.zeros_like(sum_ref)

    neg_inv = neg_inv_ref[0]
    xj = jnp.tanh(xj_ref[...]) * (-2.0 * neg_inv)
    yk = jnp.tanh(yk_ref[...])
    xy = lax.dot_general(
        xj, yk,
        dimension_numbers=(((1,), (1,)), ((0,), (0,))),
        preferred_element_type=jnp.float32,
        precision=lax.Precision.HIGHEST,
    )
    kt = jnp.exp(jnp.maximum(xy + cb_ref[...] * neg_inv, -88.0))   # (bt, tj, tk)
    sum_ref[...] += jnp.sum(kt, axis=(0, 1), keepdims=True)        # (1, 1, tk)


# -----------------------------------------------------------------------------
# Pallas call wrappers
# -----------------------------------------------------------------------------
def _sumsq(x, y):
    """tanh -> column squared-sums. Returns XX, YY of shape (B, 1, N)."""
    B, D, N = x.shape
    tk = _pick_tile(N, _tile_target())
    bt = _pick_sumsq_batch_tile(B, D, N)
    return pl.pallas_call(
        _sumsq_kernel,
        out_shape=(jax.ShapeDtypeStruct((B, 1, N), jnp.float32),
                   jax.ShapeDtypeStruct((B, 1, N), jnp.float32)),
        grid_spec=pltpu.PrefetchScalarGridSpec(
            num_scalar_prefetch=0,
            grid=(B // bt, N // tk),
            in_specs=[pl.BlockSpec((bt, D, tk), lambda b, k: (b, 0, k)),
                      pl.BlockSpec((bt, D, tk), lambda b, k: (b, 0, k))],
            out_specs=[pl.BlockSpec((bt, 1, tk), lambda b, k: (b, 0, k)),
                       pl.BlockSpec((bt, 1, tk), lambda b, k: (b, 0, k))],
        ),
        compiler_params=_mosaic_params(("parallel", "parallel")),
    )(x, y)


def _gram(x, y, tj, tk, bt):
    """Batched tanh(X)^T tanh(Y) Gram matrix, (B, N, N) (median path only)."""
    B, D, N = x.shape
    return pl.pallas_call(
        _gram_kernel,
        out_shape=jax.ShapeDtypeStruct((B, N, N), jnp.float32),
        grid_spec=pltpu.PrefetchScalarGridSpec(
            num_scalar_prefetch=0,
            grid=(B // bt, N // tj, N // tk),
            in_specs=[pl.BlockSpec((bt, D, tj), lambda b, j, k: (b, 0, j)),
                      pl.BlockSpec((bt, D, tk), lambda b, j, k: (b, 0, k))],
            out_specs=pl.BlockSpec((bt, tj, tk), lambda b, j, k: (b, j, k)),
        ),
        compiler_params=_mosaic_params(("parallel", "parallel", "parallel")),
    )(x, y)


def _fused_k(neg_inv, colbias, x, y, tj, tk, bt):
    """Full (B, N, N) kernel matrix, single fused pass."""
    B, D, N = x.shape
    return pl.pallas_call(
        _rbf_fused_kernel,
        out_shape=jax.ShapeDtypeStruct((B, N, N), jnp.float32),
        grid_spec=pltpu.PrefetchScalarGridSpec(
            num_scalar_prefetch=0,
            grid=(B // bt, N // tj, N // tk),
            in_specs=[
                pl.BlockSpec(memory_space=pltpu.MemorySpace.SMEM),        # neg_inv
                pl.BlockSpec((bt, 1, tk), lambda b, j, k: (b, 0, k)),     # colbias
                pl.BlockSpec((bt, D, tj), lambda b, j, k: (b, 0, j)),     # xj
                pl.BlockSpec((bt, D, tk), lambda b, j, k: (b, 0, k)),     # yk
            ],
            out_specs=pl.BlockSpec((bt, tj, tk), lambda b, j, k: (b, j, k)),
        ),
        compiler_params=_mosaic_params(("parallel", "parallel", "parallel")),
    )(neg_inv, colbias, x, y)


def _fused_sum(neg_inv, colbias, x, y, tj, tk, bt):
    """sum(K) without materializing K (for the MMD-loss path)."""
    B, D, N = x.shape
    gb, nj, nk = B // bt, N // tj, N // tk
    partial = pl.pallas_call(
        _rbf_sum_kernel,
        out_shape=jax.ShapeDtypeStruct((gb, 1, tk), jnp.float32),
        grid_spec=pltpu.PrefetchScalarGridSpec(
            num_scalar_prefetch=0,
            grid=(gb, nj, nk),
            in_specs=[
                pl.BlockSpec(memory_space=pltpu.MemorySpace.SMEM),        # neg_inv
                pl.BlockSpec((bt, 1, tk), lambda b, j, k: (b, 0, k)),     # colbias
                pl.BlockSpec((bt, D, tj), lambda b, j, k: (b, 0, j)),     # xj
                pl.BlockSpec((bt, D, tk), lambda b, j, k: (b, 0, k)),     # yk
            ],
            # output block resident across the (arbitrary) j, k axes.
            out_specs=pl.BlockSpec((1, 1, tk), lambda b, j, k: (b, 0, 0)),
        ),
        compiler_params=_mosaic_params(("parallel", "arbitrary", "arbitrary")),
    )(neg_inv, colbias, x, y)
    return jnp.sum(partial)


# -----------------------------------------------------------------------------
# RBF forward (Pallas)
# -----------------------------------------------------------------------------
def rbf_median_bandwidth(x, y):
    """bandwidth = median(XX) + median(YY) - 2*median(XY) (torch lower-median)."""
    x = jnp.asarray(x, jnp.float32)
    y = jnp.asarray(y, jnp.float32)
    B, D, N = x.shape
    xp, yp, Np = _pad_lanes(x, y, N)
    target = _tile_target()
    tj = _pick_tile(Np, target)
    tk = _pick_tile(Np, target)
    bt = _pick_batch_tile(B, D, Np, tj, tk)
    xx, yy = _sumsq(xp, yp)
    xy = _gram(xp, yp, tj, tk, bt)
    # TODO(synk): torch.median needs a global selection; kept as a plain-JAX
    # sort (a selection-based median would avoid the O(N^2 log N^2) sort).
    return (_torch_median(xx[:, :, :N]) + _torch_median(yy[:, :, :N])
            - 2.0 * _torch_median(xy[:, :N, :N]))


def rbf_forward(x, y, *, num_kernels=5, bandwidth=None, eps=0.01,
                return_bandwidth=False):
    """JAX/Pallas equivalent of RBF(num_kernels, bandwidth, eps).forward(X, Y)."""
    del num_kernels  # unused in the reference forward pass as well
    x = jnp.asarray(x, jnp.float32)
    y = jnp.asarray(y, jnp.float32)
    B, D, N = x.shape
    assert y.shape == (B, D, N)
    xp, yp, Np = _pad_lanes(x, y, N)
    target = _tile_target()
    tj = _pick_tile(Np, target)
    tk = _pick_tile(Np, target)
    bt = _pick_batch_tile(B, D, Np, tj, tk)
    # TODO(synk): for very large D add a D (contraction) grid axis with a VMEM
    # f32 accumulator; blocks here load the full D extent.

    xx, yy = _sumsq(xp, yp)                       # (B, 1, Np)
    if bandwidth is None:
        xy = _gram(xp, yp, tj, tk, bt)            # (B, Np, Np), median path only
        bandwidth = (_torch_median(xx[:, :, :N]) + _torch_median(yy[:, :, :N])
                     - 2.0 * _torch_median(xy[:, :N, :N]))

    bandwidth = jnp.asarray(bandwidth, jnp.float32)
    neg_inv = jnp.reshape(-1.0 / (bandwidth + jnp.float32(eps)), (1,))
    colbias = xx + yy                             # (B, 1, Np)

    k = _fused_k(neg_inv, colbias, xp, yp, tj, tk, bt)
    if Np != N:
        k = k[:, :N, :N]
    if return_bandwidth:
        return k, bandwidth
    return k


@functools.partial(jax.jit, static_argnames=("eps",))
def _rbf_mean(x, y, bandwidth, eps):
    """mean(K) over a stacked batch without materializing K (N % 128 == 0)."""
    B, D, N = x.shape
    assert N % 128 == 0
    target = _tile_target()
    tj = _pick_tile(N, target)
    tk = _pick_tile(N, target)
    bt = _pick_batch_tile(B, D, N, tj, tk)
    xx, yy = _sumsq(x, y)
    colbias = xx + yy
    neg_inv = jnp.reshape(
        -1.0 / (jnp.asarray(bandwidth, jnp.float32) + jnp.float32(eps)), (1,))
    total = _fused_sum(neg_inv, colbias, x, y, tj, tk, bt)
    return total / (B * N * N)


# -----------------------------------------------------------------------------
# MMD loss (driver around the Pallas RBF kernels)
# -----------------------------------------------------------------------------
def _split_minibatches(x, y, batch_size, key):
    """Mirror of MMDLoss.forward's movedim + randperm + mini-batch slicing."""
    x = jnp.moveaxis(jnp.asarray(x, jnp.float32), 1, 0)
    y = jnp.moveaxis(jnp.asarray(y, jnp.float32), 1, 0)
    kx, ky = jax.random.split(key)
    min_samples = min(x.shape[0], y.shape[0])
    idx_x = jax.random.permutation(kx, x.shape[0])[:min_samples]
    idx_y = jax.random.permutation(ky, y.shape[0])[:min_samples]
    x_, y_ = x[idx_x], y[idx_y]
    nx, ny = x_.shape[0], y_.shape[0]
    if batch_size == -1:
        return [x_], [y_]
    xbs = [x_[i:i + batch_size] for i in range(0, nx - batch_size, batch_size)]
    ybs = [y_[i:i + batch_size] for i in range(0, ny - batch_size, batch_size)]
    return xbs, ybs


def mmd_loss(x, y, *, batch_size=32, bandwidth=None, eps=0.01, key=None):
    """JAX equivalent of MMDLoss(kernel=RBF(bandwidth, eps), batch_size).forward.

    torch.randperm is reproduced with jax.random under `key`. Like the stateful
    torch RBF, the bandwidth is computed once on the first mini-batch pair and
    reused for every pair; all pairs are then stacked along the batch axis and
    evaluated by ONE fused, sum-reduced pallas_call (mean(K_all) == the average
    of the per-pair means since every pair has identical shape).
    """
    if key is None:
        key = jax.random.PRNGKey(0)
    xbs, ybs = _split_minibatches(x, y, batch_size, key)

    if bandwidth is None:
        bandwidth = rbf_median_bandwidth(xbs[0], ybs[0])
    bandwidth = jnp.asarray(bandwidth, jnp.float32)

    # Stack all (x_mb, y_mb) pairs along the batch axis (torch loop order).
    x_all = jnp.concatenate([xb for xb in xbs for _ in ybs], axis=0)
    y_all = jnp.concatenate([yb for _ in xbs for yb in ybs], axis=0)

    if x_all.shape[-1] % 128 == 0:
        return _rbf_mean(x_all, y_all, bandwidth, eps)
    # Fallback for awkward N: still a single batched call, K materialized once.
    k = rbf_forward(x_all, y_all, bandwidth=bandwidth, eps=eps)
    return jnp.mean(k)


# -----------------------------------------------------------------------------
# Pure-JAX references (mirror the PyTorch semantics) for verification
# -----------------------------------------------------------------------------
def _rbf_reference(x, y, *, bandwidth=None, eps=0.01):
    x = jnp.tanh(jnp.asarray(x, jnp.float32))
    y = jnp.tanh(jnp.asarray(y, jnp.float32))
    xx = jnp.sum(x ** 2, axis=1, keepdims=True)
    yy = jnp.sum(y ** 2, axis=1, keepdims=True)
    xy = jnp.einsum("bij,bik->bjk", x, y, precision=lax.Precision.HIGHEST)
    if bandwidth is None:
        bandwidth = _torch_median(xx) + _torch_median(yy) - 2.0 * _torch_median(xy)
    pre = xx - 2.0 * xy + yy
    div = jnp.minimum(pre / (bandwidth + eps), 88.0)
    return jnp.exp(-div), bandwidth


def _mmd_reference(x, y, *, batch_size=32, bandwidth=None, eps=0.01, key=None):
    if key is None:
        key = jax.random.PRNGKey(0)
    xbs, ybs = _split_minibatches(x, y, batch_size, key)
    total = jnp.float32(0.0)
    bw = bandwidth
    for xb in xbs:
        for yb in ybs:
            k, bw = _rbf_reference(xb, yb, bandwidth=bw, eps=eps)
            total = total + jnp.mean(k)
    return total / (len(xbs) * len(ybs))


if __name__ == "__main__":
    key = jax.random.PRNGKey(0)
    k1, k2, k3, k4, k5, k6 = jax.random.split(key, 6)

    # --- Test 1: RBF, data-dependent (median) bandwidth, padded lanes --------
    B, D, N = 2, 8, 120   # N not a multiple of 128 -> exercises the pad path
    X = jax.random.normal(k1, (B, D, N), dtype=jnp.float32)
    Y = jax.random.normal(k2, (B, D, N), dtype=jnp.float32)
    K = jax.block_until_ready(rbf_forward(X, Y))
    K_ref, _ = _rbf_reference(X, Y)
    assert K.shape == (B, N, N)
    assert bool(jnp.allclose(K, K_ref, rtol=1e-4, atol=1e-5)), "RBF (median bw) mismatch"

    # --- Test 2: RBF, fixed bandwidth, tiled (N, N) output --------------------
    B2, D2, N2 = 2, 8, 1280
    X2 = jax.random.normal(k3, (B2, D2, N2), dtype=jnp.float32)
    Y2 = jax.random.normal(k4, (B2, D2, N2), dtype=jnp.float32)
    K2 = jax.block_until_ready(rbf_forward(X2, Y2, bandwidth=2.0))
    K2_ref, _ = _rbf_reference(X2, Y2, bandwidth=2.0)
    assert bool(jnp.allclose(K2, K2_ref, rtol=1e-4, atol=1e-5)), "RBF (tiled) mismatch"

    # --- Test 3: full MMD loss over mini-batch pairs (fused-sum path) ---------
    d0, samples, d2 = 8, 40, 128   # samples live on dim 1 (torch.movedim(X, 1, 0))
    Xm = jax.random.normal(k5, (d0, samples, d2), dtype=jnp.float32)
    Ym = jax.random.normal(k6, (d0, samples, d2), dtype=jnp.float32) * 1.2 + 0.1
    loss = jax.block_until_ready(
        mmd_loss(Xm, Ym, batch_size=16, key=jax.random.PRNGKey(0)))
    loss_ref = _mmd_reference(Xm, Ym, batch_size=16, key=jax.random.PRNGKey(0))
    assert bool(jnp.allclose(loss, loss_ref, rtol=1e-3, atol=1e-6)), "MMD mismatch"

    print("KERNEL_OK")
</pallas_src>

<mosaic_0001>
module attributes {stable_mosaic.version = 11 : i64} {
  func.func @_sumsq_kernel(%arg0: i32, %arg1: i32, %arg2: memref<1x8x128xf32, #tpu.memory_space<vmem>>, %arg3: memref<1x8x128xf32, #tpu.memory_space<vmem>>, %arg4: memref<1x1x128xf32, #tpu.memory_space<vmem>>, %arg5: memref<1x1x128xf32, #tpu.memory_space<vmem>>) attributes {dimension_semantics = [#tpu.dimension_semantics<parallel>, #tpu.dimension_semantics<parallel>], iteration_bounds = array<i64: 2, 1>, scalar_prefetch = 0 : i64, scratch_operands = 0 : i64, tpu.core_type = #tpu.core_type<tc>, window_params = [{transform_indices = @transform_0, window_bounds = array<i64: 1, 8, 128>}, {transform_indices = @transform_1, window_bounds = array<i64: 1, 8, 128>}, {transform_indices = @transform_2, window_bounds = array<i64: 1, 1, 128>}, {transform_indices = @transform_3, window_bounds = array<i64: 1, 1, 128>}]} {
    %c0 = arith.constant 0 : index
    %c0_0 = arith.constant 0 : index
    %c0_1 = arith.constant 0 : index
    %0 = vector.load %arg2[%c0, %c0_0, %c0_1] : memref<1x8x128xf32, #tpu.memory_space<vmem>>, vector<1x8x128xf32>
    %1 = math.tanh %0 : vector<1x8x128xf32>
    %c0_2 = arith.constant 0 : index
    %c0_3 = arith.constant 0 : index
    %c0_4 = arith.constant 0 : index
    %2 = vector.load %arg3[%c0_2, %c0_3, %c0_4] : memref<1x8x128xf32, #tpu.memory_space<vmem>>, vector<1x8x128xf32>
    %3 = math.tanh %2 : vector<1x8x128xf32>
    %4 = arith.mulf %1, %1 : vector<1x8x128xf32>
    %cst = arith.constant dense<0.000000e+00> : vector<1x128xf32>
    %5 = vector.multi_reduction <add>, %4, %cst [1] : vector<1x8x128xf32> to vector<1x128xf32>
    %6 = vector.shape_cast %5 : vector<1x128xf32> to vector<1x1x128xf32>
    %c0_5 = arith.constant 0 : index
    %c0_6 = arith.constant 0 : index
    %c0_7 = arith.constant 0 : index
    %7 = vector.load %arg4[%c0_5, %c0_6, %c0_7] : memref<1x1x128xf32, #tpu.memory_space<vmem>>, vector<1x1x128xf32>
    tpu.vector_store %arg4[%c0_5, %c0_6, %c0_7], %6 {strides = array<i32>} : memref<1x1x128xf32, #tpu.memory_space<vmem>>, vector<1x1x128xf32>,
    %8 = arith.mulf %3, %3 : vector<1x8x128xf32>
    %cst_8 = arith.constant dense<0.000000e+00> : vector<1x128xf32>
    %9 = vector.multi_reduction <add>, %8, %cst_8 [1] : vector<1x8x128xf32> to vector<1x128xf32>
    %10 = vector.shape_cast %9 : vector<1x128xf32> to vector<1x1x128xf32>
    %c0_9 = arith.constant 0 : index
    %c0_10 = arith.constant 0 : index
    %c0_11 = arith.constant 0 : index
    %11 = vector.load %arg5[%c0_9, %c0_10, %c0_11] : memref<1x1x128xf32, #tpu.memory_space<vmem>>, vector<1x1x128xf32>
    tpu.vector_store %arg5[%c0_9, %c0_10, %c0_11], %10 {strides = array<i32>} : memref<1x1x128xf32, #tpu.memory_space<vmem>>, vector<1x1x128xf32>,
    return
  }
  func.func @transform_0(%arg0: i32, %arg1: i32) -> (i32, i32, i32) {
    %c0_i32 = arith.constant 0 : i32
    %c0_i32_0 = arith.constant 0 : i32
    return %arg0, %c0_i32, %arg1 : i32, i32, i32
  }
  func.func @transform_1(%arg0: i32, %arg1: i32) -> (i32, i32, i32) {
    %c0_i32 = arith.constant 0 : i32
    %c0_i32_0 = arith.constant 0 : i32
    return %arg0, %c0_i32, %arg1 : i32, i32, i32
  }
  func.func @transform_2(%arg0: i32, %arg1: i32) -> (i32, i32, i32) {
    %c0_i32 = arith.constant 0 : i32
    %c0_i32_0 = arith.constant 0 : i32
    return %arg0, %c0_i32, %arg1 : i32, i32, i32
  }
  func.func @transform_3(%arg0: i32, %arg1: i32) -> (i32, i32, i32) {
    %c0_i32 = arith.constant 0 : i32
    %c0_i32_0 = arith.constant 0 : i32
    return %arg0, %c0_i32, %arg1 : i32, i32, i32
  }
}

</mosaic_0001>

<llo_original>
// kernel: tpu_custom_call.1
$region0: #{tpu_custom_call.1}
  #allocation0 [shape = 'u32[]', space=smem, size = 0x4, offset = 0x4, fixed_abs, tag = 'smem constant byte address 0x4 - core index']
  #allocation1 [shape = 'u32[72,128]{1,0:T(1,128)}', space=vmem, size = 0x9000, scoped, tag = 'internal scratch']
  %s0 = inlined_call_operand.hbm [shape: f32[2,8,128], index: 0, kind: input, shape index: {}]
  %s1 = inlined_call_operand.hbm [shape: f32[2,8,128], index: 1, kind: input, shape index: {}]
  %s2 = inlined_call_operand.hbm [shape: f32[2,1,128], index: 2, kind: output, shape index: {0}]
  %s3 = inlined_call_operand.hbm [shape: f32[2,1,128], index: 3, kind: output, shape index: {1}]
  %4 = xla_tuple %s2, %s3
  %s5 = sld [smem:[#allocation0]]
  $region57: #{tpu_custom_call.1} parent=0
    _
  %s7 = ssub.s32 1, %s5
  %s8 = scalar_select 0, %s7, %s5
  $region1: #{tpu_custom_call.1} parent=0
    #allocation2 [shape = 'u8[8192]{0}', space=vmem, size = 0x2000, scoped, tag = 'input window, operand 0']
    #allocation3 [shape = 's32[2]{0}', space=sflag, size = 0x8, scoped, tag = 'scoped memory for tpu_custom_call.1']
    #allocation4 [shape = 's32[2]{0}', space=sflag, size = 0x8, scoped, tag = 'scoped memory for tpu_custom_call.1']
    #allocation5 [shape = 'u8[8192]{0}', space=vmem, size = 0x2000, scoped, tag = 'input window, operand 1']
    #allocation6 [shape = 's32[2]{0}', space=sflag, size = 0x8, scoped, tag = 'scoped memory for tpu_custom_call.1']
    #allocation7 [shape = 'u8[1024]{0}', space=vmem, size = 0x400, scoped, tag = 'output window, operand 0']
    #allocation8 [shape = 'u8[1024]{0}', space=vmem, size = 0x400, scoped, tag = 'output window, operand 1']
    #allocation9 [shape = 's32[2]{0}', space=sflag, size = 0x8, scoped, tag = 'scoped memory for tpu_custom_call.1']
    %9 = vsyncpa [#allocation3], 0
    %s10 = scalar_lea.sflag [#allocation3], 1
    %11 = vsyncpa %s10, 0
    %12 = vsyncpa [#allocation6], 0
    %s13 = scalar_lea.sflag [#allocation6], 1
    %14 = vsyncpa %s13, 0
    %15 = vsyncpa [#allocation4], 0
    %s16 = scalar_lea.sflag [#allocation4], 1
    %17 = vsyncpa %s16, 0
    %18 = vsyncpa [#allocation9], 0
    %s19 = scalar_lea.sflag [#allocation9], 1
    %20 = vsyncpa %s19, 0
    loop: start=0, step=1, limit=4
    $region2: #{tpu_custom_call.1} parent=1 // loop_pre_header
      _
    $region3: #{tpu_custom_call.1} parent=1 // loop_header
      %s22 = sphi 0, %s26
      %p23 = scmp.ge.s32.totalorder %s22, 4
      %s29 = sphi 0, %s41
      %s30 = sphi 0, %s37
      %s31 = sphi 0, %s29
      %s32 = sphi 0, %s30
      %s33 = sphi 0, %s31
      %s34 = sphi 0, %s32
      %s46 = sphi 0, %s48
      %s49 = sphi 0, %s46
      %s50 = sphi 0, %s49
      %s66 = sphi 0, %s50
      %s74 = sphi 0, %s76
      %s77 = sphi 0, %s74
      %s78 = sphi 0, %s77
      %s94 = sphi 0, %s78
      %s102 = sphi 0, %s104
      %s105 = sphi 0, %s102
      %s106 = sphi 0, %s105
      %s122 = sphi 0, %s106
      %s130 = sphi 0, %s132
      %s133 = sphi 0, %s130
      %s134 = sphi 0, %s133
      %s150 = sphi 0, %s134
    $region4: #{tpu_custom_call.1} parent=1 // loop_header_branch
      %25 = sbr.rel (%p23) target = $region8
    $region5: #{tpu_custom_call.1} parent=1 // loop_body
      %s27 = ssub.s32 %s22, 1
      %s28 = ssub.s32 %s22, 2
      %s35 = sadd.s32 1, %s30
      %p36 = scmp.ge.s32.totalorder %s35, 1
      %s37 = scalar_select %p36, 0, %s35
      %s38 = sadd.s32 1, %s29
      %s39 = scalar_select %p36, %s38, %s29
      %p40 = scmp.ge.s32.totalorder %s39, 2
      %s41 = scalar_select %p40, 0, %s39
      %s42 = ssub.s32 %s29, %s41
      %s43 = ssub.s32 %s30, %s37
      %s44 = sor.u32 %s42, %s43
      %p45 = scmp.eq.s32.totalorder %s44, 0
      %s47 = sadd.s32 %s46, 1
      %s48 = scalar_select %p45, %s46, %s47
      %p51 = pneg %p45
      %p52 = scmp.eq.s32.totalorder %s22, 1
      %p53 = por %p51, %p52
      %p54 = scmp.ne.s32.totalorder %s46, %s49
      %p55 = scmp.eq.s32.totalorder %s22, 0
      %p56 = por %p54, %p55
      %p57 = scmp.ne.s32.totalorder %s46, %s49
      %p58 = scmp.eq.s32.totalorder %s27, 1
      %p59 = por %p57, %p58
      %p60 = scmp.ne.s32.totalorder %s49, %s50
      %p61 = scmp.eq.s32.totalorder %s27, 0
      %p62 = por %p60, %p61
      %p63 = scmp.ne.s32.totalorder %s49, %s50
      %p64 = scmp.eq.s32.totalorder %s28, 1
      %p65 = por %p63, %p64
      %p67 = scmp.ne.s32.totalorder %s50, %s66
      %p68 = scmp.eq.s32.totalorder %s28, 0
      %p69 = por %p67, %p68
      %s70 = ssub.s32 %s29, %s41
      %s71 = ssub.s32 %s30, %s37
      %s72 = sor.u32 %s70, %s71
      %p73 = scmp.eq.s32.totalorder %s72, 0
      %s75 = sadd.s32 %s74, 1
      %s76 = scalar_select %p73, %s74, %s75
      %p79 = pneg %p73
      %p80 = scmp.eq.s32.totalorder %s22, 1
      %p81 = por %p79, %p80
      %p82 = scmp.ne.s32.totalorder %s74, %s77
      %p83 = scmp.eq.s32.totalorder %s22, 0
      %p84 = por %p82, %p83
      %p85 = scmp.ne.s32.totalorder %s74, %s77
      %p86 = scmp.eq.s32.totalorder %s27, 1
      %p87 = por %p85, %p86
      %p88 = scmp.ne.s32.totalorder %s77, %s78
      %p89 = scmp.eq.s32.totalorder %s27, 0
      %p90 = por %p88, %p89
      %p91 = scmp.ne.s32.totalorder %s77, %s78
      %p92 = scmp.eq.s32.totalorder %s28, 1
      %p93 = por %p91, %p92
      %p95 = scmp.ne.s32.totalorder %s78, %s94
      %p96 = scmp.eq.s32.totalorder %s28, 0
      %p97 = por %p95, %p96
      %s98 = ssub.s32 %s29, %s41
      %s99 = ssub.s32 %s30, %s37
      %s100 = sor.u32 %s98, %s99
      %p101 = scmp.eq.s32.totalorder %s100, 0
      %s103 = sadd.s32 %s102, 1
      %s104 = scalar_select %p101, %s102, %s103
      %p107 = pneg %p101
      %p108 = scmp.eq.s32.totalorder %s22, 1
      %p109 = por %p107, %p108
      %p110 = scmp.ne.s32.totalorder %s102, %s105
      %p111 = scmp.eq.s32.totalorder %s22, 0
      %p112 = por %p110, %p111
      %p113 = scmp.ne.s32.totalorder %s102, %s105
      %p114 = scmp.eq.s32.totalorder %s27, 1
      %p115 = por %p113, %p114
      %p116 = scmp.ne.s32.totalorder %s105, %s106
      %p117 = scmp.eq.s32.totalorder %s27, 0
      %p118 = por %p116, %p117
      %p119 = scmp.ne.s32.totalorder %s105, %s106
      %p120 = scmp.eq.s32.totalorder %s28, 1
      %p121 = por %p119, %p120
      %p123 = scmp.ne.s32.totalorder %s106, %s122
      %p124 = scmp.eq.s32.totalorder %s28, 0
      %p125 = por %p123, %p124
      %s126 = ssub.s32 %s29, %s41
      %s127 = ssub.s32 %s30, %s37
      %s128 = sor.u32 %s126, %s127
      %p129 = scmp.eq.s32.totalorder %s128, 0
      %s131 = sadd.s32 %s130, 1
      %s132 = scalar_select %p129, %s130, %s131
      %p135 = pneg %p129
      %p136 = scmp.eq.s32.totalorder %s22, 1
      %p137 = por %p135, %p136
      %p138 = scmp.ne.s32.totalorder %s130, %s133
      %p139 = scmp.eq.s32.totalorder %s22, 0
      %p140 = por %p138, %p139
      %p141 = scmp.ne.s32.totalorder %s130, %s133
      %p142 = scmp.eq.s32.totalorder %s27, 1
      %p143 = por %p141, %p142
      %p144 = scmp.ne.s32.totalorder %s133, %s134
      %p145 = scmp.eq.s32.totalorder %s27, 0
      %p146 = por %p144, %p145
      %p147 = scmp.ne.s32.totalorder %s133, %s134
      %p148 = scmp.eq.s32.totalorder %s28, 1
      %p149 = por %p147, %p148
      %p151 = scmp.ne.s32.totalorder %s134, %s150
      %p152 = scmp.eq.s32.totalorder %s28, 0
      %p153 = por %p151, %p152
      %p154 = scmp.le.s32.totalorder 1, %s22
      %p155 = scmp.lt.s32.totalorder %s22, 3
      %p156 = pnand %p154, %p155
      %p157 = pneg %p156
      // Predicated region
      $region9: #{tpu_custom_call.1} parent=5 // pred_check
        _
      $region10: #{tpu_custom_call.1} parent=5 // pred_check_branch
        %159 = sbr.rel (%p156) target = $region12
      $region11: #{tpu_custom_call.1} parent=5 // pred_region
        %s160 = ssub.s32 %s22, 1
      $region12: #{tpu_custom_call.1} parent=5 // pred_fallthru
        _
      %p161 = scmp.lt.s32.totalorder %s22, 2
      // Predicated region
      $region13: #{tpu_custom_call.1} parent=5 // pred_check
        %p162 = pneg %p161
      $region14: #{tpu_custom_call.1} parent=5 // pred_check_branch
        %164 = sbr.rel (%p162) target = $region16
      $region15: #{tpu_custom_call.1} parent=5 // pred_region
        // Predicated region
        $region17: #{tpu_custom_call.1} parent=15 // pred_check
          %p165 = pneg %p56
        $region18: #{tpu_custom_call.1} parent=15 // pred_check_branch
          %167 = sbr.rel (%p165) target = $region20
        $region19: #{tpu_custom_call.1} parent=15 // pred_region
          %s168 = sand.u32 %s46, 1
          %s169 = scalar_lea.sflag [#allocation3], %s168
          %s170 = sand.u32 %s46, 1
          %s171 = smul.addr %s170, 8
          %s172 = scalar_lea.vmem [#allocation2], %s171
          %174 = vsyncadd %s169, 0
          %s175 = sadd.s32 %s30, %s29
          %s176 = smul.addr %s175, 8
          %s177 = scalar_lea.hbm %s0, %s176
          %s179 = sshll.u32 %s177, 4
          %s180 = int_to_ptr.hbm [resolvable:$true] %s179
          %s181 = sshll.u32 %s172, 4
          %s182 = int_to_ptr.vmem [resolvable:$true] %s181
          %184 = dma.hbm_to_vmem [thread:$0]  %s180, 128, %s182, %s169
        $region20: #{tpu_custom_call.1} parent=15 // pred_fallthru
          _
        // Predicated region
        $region21: #{tpu_custom_call.1} parent=15 // pred_check
          %p185 = pneg %p84
        $region22: #{tpu_custom_call.1} parent=15 // pred_check_branch
          %187 = sbr.rel (%p185) target = $region24
        $region23: #{tpu_custom_call.1} parent=15 // pred_region
          %s188 = sand.u32 %s74, 1
          %s189 = scalar_lea.sflag [#allocation6], %s188
          %s190 = sand.u32 %s74, 1
          %s191 = smul.addr %s190, 8
          %s192 = scalar_lea.vmem [#allocation5], %s191
          %194 = vsyncadd %s189, 0
          %s195 = sadd.s32 %s30, %s29
          %s196 = smul.addr %s195, 8
          %s197 = scalar_lea.hbm %s1, %s196
          %s199 = sshll.u32 %s197, 4
          %s200 = int_to_ptr.hbm [resolvable:$true] %s199
          %s201 = sshll.u32 %s192, 4
          %s202 = int_to_ptr.vmem [resolvable:$true] %s201
          %204 = dma.hbm_to_vmem [thread:$0]  %s200, 128, %s202, %s189
        $region24: #{tpu_custom_call.1} parent=15 // pred_fallthru
          _
      $region16: #{tpu_custom_call.1} parent=5 // pred_fallthru
        _
      %p205 = scmp.le.s32.totalorder 1, %s22
      %p206 = scmp.lt.s32.totalorder %s22, 3
      %p207 = pnand %p205, %p206
      %p208 = pneg %p207
      // Predicated region
      $region25: #{tpu_custom_call.1} parent=5 // pred_check
        _
      $region26: #{tpu_custom_call.1} parent=5 // pred_check_branch
        %210 = sbr.rel (%p207) target = $region28
      $region27: #{tpu_custom_call.1} parent=5 // pred_region
        %s211 = ssub.s32 %s22, 1
        %s212 = sand.u32 %s49, 1
        %s213 = scalar_lea.sflag [#allocation3], %s212
        %s214 = sand.u32 %s49, 1
        %s215 = smul.addr %s214, 8
        %s216 = scalar_lea.vmem [#allocation2], %s215
        // Predicated region
        $region29: #{tpu_custom_call.1} parent=27 // pred_check
          %p217 = pneg %p62
        $region30: #{tpu_custom_call.1} parent=27 // pred_check_branch
          %219 = sbr.rel (%p217) target = $region32
        $region31: #{tpu_custom_call.1} parent=27 // pred_region
          %221 = dma.done %s213, 128
        $region32: #{tpu_custom_call.1} parent=27 // pred_fallthru
          _
        %s222 = sand.u32 %s77, 1
        %s223 = scalar_lea.sflag [#allocation6], %s222
        %s224 = sand.u32 %s77, 1
        %s225 = smul.addr %s224, 8
        %s226 = scalar_lea.vmem [#allocation5], %s225
        // Predicated region
        $region33: #{tpu_custom_call.1} parent=27 // pred_check
          %p227 = pneg %p90
        $region34: #{tpu_custom_call.1} parent=27 // pred_check_branch
          %229 = sbr.rel (%p227) target = $region36
        $region35: #{tpu_custom_call.1} parent=27 // pred_region
          %231 = dma.done %s223, 128
        $region36: #{tpu_custom_call.1} parent=27 // pred_fallthru
          _
        %s232 = sand.u32 %s49, 1
        %s233 = scalar_lea.sflag [#allocation3], %s232
        %s234 = sand.u32 %s49, 1
        %s235 = smul.addr %s234, 8
        %s236 = scalar_lea.vmem [#allocation2], %s235
        %p237 = pneg %p62
        %p238 = pneg %p59
        %s239 = sand.u32 %s77, 1
        %s240 = scalar_lea.sflag [#allocation6], %s239
        %s241 = sand.u32 %s77, 1
        %s242 = smul.addr %s241, 8
        %s243 = scalar_lea.vmem [#allocation5], %s242
        %p244 = pneg %p90
        %p245 = pneg %p87
        %p246 = pneg %p118
        %p247 = pneg %p115
        %s248 = sand.u32 %s105, 1
        %s249 = scalar_lea.sflag [#allocation4], %s248
        %s250 = sand.u32 %s105, 1
        %s251 = scalar_lea.vmem [#allocation7], %s250
        %p252 = pneg %p146
        %p253 = pneg %p143
        %s254 = sand.u32 %s133, 1
        %s255 = scalar_lea.sflag [#allocation9], %s254
        %s256 = sand.u32 %s133, 1
        %s257 = scalar_lea.vmem [#allocation8], %s256
        %v258 = vld [vmem:[%s216] sm:$0xff]
        %v259 = vtanh.pop %v258
        %v260 = vld [vmem:[%s226] sm:$0xff]
        %v261 = vtanh.pop %v260
        %v262 = vmul.f32 %v259, %v259
        %v263 = vrot.slane %v262, 4
        %v264 = vadd.f32 %v262, %v263
        %v265 = vrot.slane %v264, 2
        %v266 = vadd.f32 %v264, %v265
        %v267 = vrot.slane %v266, 1
        %v268 = vadd.f32 %v266, %v267
        %269 = vst [vmem:[%s251] sm:$0x1] %v268
        %v270 = vmul.f32 %v261, %v261
        %v271 = vrot.slane %v270, 4
        %v272 = vadd.f32 %v270, %v271
        %v273 = vrot.slane %v272, 2
        %v274 = vadd.f32 %v272, %v273
        %v275 = vrot.slane %v274, 1
        %v276 = vadd.f32 %v274, %v275
        %277 = vst [vmem:[%s257] sm:$0x1] %v276
        %s278 = sand.u32 %s105, 1
        %s279 = scalar_lea.sflag [#allocation4], %s278
        %s280 = sand.u32 %s105, 1
        %s281 = scalar_lea.vmem [#allocation7], %s280
        %s282 = sand.u32 %s133, 1
        %s283 = scalar_lea.sflag [#allocation9], %s282
        %s284 = sand.u32 %s133, 1
        %s285 = scalar_lea.vmem [#allocation8], %s284
        // Predicated region
        $region37: #{tpu_custom_call.1} parent=27 // pred_check
          %p286 = pneg %p115
        $region38: #{tpu_custom_call.1} parent=27 // pred_check_branch
          %288 = sbr.rel (%p286) target = $region40
        $region39: #{tpu_custom_call.1} parent=27 // pred_region
          %290 = vsyncadd %s279, 0
          %s291 = sadd.s32 %s32, %s31
          %s292 = scalar_lea.hbm %s2, %s291
          %s294 = sshll.u32 %s281, 4
          %s295 = int_to_ptr.vmem [resolvable:$true] %s294
          %s296 = sshll.u32 %s292, 4
          %s297 = int_to_ptr.hbm [resolvable:$true] %s296
          %299 = dma.vmem_to_hbm [thread:$0]  %s295, 16, %s297, %s279
        $region40: #{tpu_custom_call.1} parent=27 // pred_fallthru
          _
        // Predicated region
        $region41: #{tpu_custom_call.1} parent=27 // pred_check
          %p300 = pneg %p143
        $region42: #{tpu_custom_call.1} parent=27 // pred_check_branch
          %302 = sbr.rel (%p300) target = $region44
        $region43: #{tpu_custom_call.1} parent=27 // pred_region
          %304 = vsyncadd %s283, 0
          %s305 = sadd.s32 %s32, %s31
          %s306 = scalar_lea.hbm %s3, %s305
          %s308 = sshll.u32 %s285, 4
          %s309 = int_to_ptr.vmem [resolvable:$true] %s308
          %s310 = sshll.u32 %s306, 4
          %s311 = int_to_ptr.hbm [resolvable:$true] %s310
          %313 = dma.vmem_to_hbm [thread:$0]  %s309, 16, %s311, %s283
        $region44: #{tpu_custom_call.1} parent=27 // pred_fallthru
          _
      $region28: #{tpu_custom_call.1} parent=5 // pred_fallthru
        _
      %p314 = scmp.le.s32.totalorder 2, %s22
      // Predicated region
      $region45: #{tpu_custom_call.1} parent=5 // pred_check
        %p315 = pneg %p314
      $region46: #{tpu_custom_call.1} parent=5 // pred_check_branch
        %317 = sbr.rel (%p315) target = $region48
      $region47: #{tpu_custom_call.1} parent=5 // pred_region
        %s318 = ssub.s32 %s22, 2
        // Predicated region
        $region49: #{tpu_custom_call.1} parent=47 // pred_check
          %p319 = pneg %p121
        $region50: #{tpu_custom_call.1} parent=47 // pred_check_branch
          %321 = sbr.rel (%p319) target = $region52
        $region51: #{tpu_custom_call.1} parent=47 // pred_region
          %s322 = sand.u32 %s106, 1
          %s323 = scalar_lea.sflag [#allocation4], %s322
          %s324 = sand.u32 %s106, 1
          %s325 = scalar_lea.vmem [#allocation7], %s324
          %327 = dma.done %s323, 16
        $region52: #{tpu_custom_call.1} parent=47 // pred_fallthru
          _
        // Predicated region
        $region53: #{tpu_custom_call.1} parent=47 // pred_check
          %p328 = pneg %p149
        $region54: #{tpu_custom_call.1} parent=47 // pred_check_branch
          %330 = sbr.rel (%p328) target = $region56
        $region55: #{tpu_custom_call.1} parent=47 // pred_region
          %s331 = sand.u32 %s134, 1
          %s332 = scalar_lea.sflag [#allocation9], %s331
          %s333 = sand.u32 %s134, 1
          %s334 = scalar_lea.vmem [#allocation8], %s333
          %336 = dma.done %s332, 16
        $region56: #{tpu_custom_call.1} parent=47 // pred_fallthru
          _
      $region48: #{tpu_custom_call.1} parent=5 // pred_fallthru
        _
    $region6: #{tpu_custom_call.1} parent=1 // loop_footer
      %s26 = sadd.s32 1, %s22
    $region7: #{tpu_custom_call.1} parent=1 // loop_footer_branch
      %21 = sbr.rel target = $region3
    $region8: #{tpu_custom_call.1} parent=1 // loop_exit
      _
    %337 = vsyncpa [#allocation3], 1
    %s338 = scalar_lea.sflag [#allocation3], 1
    %339 = vsyncpa %s338, 1
    %340 = vsyncpa [#allocation6], 1
    %s341 = scalar_lea.sflag [#allocation6], 1
    %342 = vsyncpa %s341, 1
    %343 = vsyncpa [#allocation4], 1
    %s344 = scalar_lea.sflag [#allocation4], 1
    %345 = vsyncpa %s344, 1
    %346 = vsyncpa [#allocation9], 1
    %s347 = scalar_lea.sflag [#allocation9], 1
    %348 = vsyncpa %s347, 1

</llo_original>
